<compile_context>
chip_gen: v5e
topology: v5e:2x2
jax: 0.10.0
libtpu: 0.0.40
codegen_flags: <defaults>
</compile_context>

<pallas_src>
import jax
import jax.numpy as jnp
from jax.experimental import pallas as pl
from jax.experimental.pallas import tpu as pltpu

# ----------------------------------------------------------------------------
# Layer sizes from the PyTorch module.
# ----------------------------------------------------------------------------
DIMS = [150, 128, 64, 32, 16, 8, 5]   # in -> ... -> out
N_LAYERS = len(DIMS) - 1

LANE = 128      # pad the 5-wide output to a full lane register (dense stores)
SUBLANE = 8     # f32 sublane granule
MAX_TB = 512    # batch tile; ~1.5 MiB working set, fits any TPU gen comfortably


def _round_up(x, m):
    return (x + m - 1) // m * m


# ----------------------------------------------------------------------------
# Kernel: one MXU matmul + bias per batch tile, lane-dense 128-wide store.
# ----------------------------------------------------------------------------
def mlp_kernel(x_ref, w_ref, b_ref, o_ref):
    o_ref[...] = (
        jnp.dot(x_ref[...], w_ref[...], preferred_element_type=jnp.float32)
        + b_ref[...]
    )


# ----------------------------------------------------------------------------
# Wrapper: collapse the affine chain, pad, tile the batch, call Pallas.
# ----------------------------------------------------------------------------
def collapse_params(weights, biases):
    """Fold the activation-free chain into one (150, 5) matmul + (1, 5) bias,
    then zero-pad the output dim to 128 lanes for dense kernel stores."""
    w_eff = weights[0]
    b_eff = biases[0]
    for w, b in zip(weights[1:], biases[1:]):
        w_eff = w_eff @ w
        b_eff = b_eff @ w + b
    out_dim = w_eff.shape[1]
    w_pad = jnp.zeros((w_eff.shape[0], LANE), jnp.float32).at[:, :out_dim].set(w_eff)
    b_pad = jnp.zeros((1, LANE), jnp.float32).at[:, :out_dim].set(b_eff)
    return w_pad, b_pad


def mlp_forward(x, weights, biases):
    """x: (B, 150) float32. weights[i]: (in, out). biases[i]: (1, out)."""
    B, d_in = x.shape
    assert d_in == DIMS[0]

    # NOTE: for tiny batches (B ~< 64) a plain fused XLA dot is at least as
    # fast (the kernel is pure launch overhead); we always take the Pallas
    # path here so the kernel is exercised.
    w_eff, b_eff = collapse_params(weights, biases)

    # Batch tile: largest tile up to MAX_TB, sublane-aligned so the BlockSpec
    # satisfies the (8, 128) constraint.  Pad the batch to a tile multiple.
    tb = min(MAX_TB, _round_up(B, SUBLANE))
    b_padded = _round_up(B, tb)
    if b_padded != B:
        x = jnp.pad(x, ((0, b_padded - B), (0, 0)))

    grid = (pl.cdiv(b_padded, tb),)

    out = pl.pallas_call(
        mlp_kernel,
        grid=grid,
        in_specs=[
            # x: streamed per batch tile (double-buffered by Pallas).
            pl.BlockSpec((tb, DIMS[0]), lambda i: (i, 0)),
            # Collapsed weight matrix: constant index_map -> VMEM-resident.
            pl.BlockSpec((DIMS[0], LANE), lambda i: (0, 0)),
            # Collapsed bias: VMEM-resident.
            pl.BlockSpec((1, LANE), lambda i: (0, 0)),
        ],
        out_specs=pl.BlockSpec((tb, LANE), lambda i: (i, 0)),
        out_shape=jax.ShapeDtypeStruct((b_padded, LANE), jnp.float32),
        compiler_params=pltpu.CompilerParams(
            # Batch tiles are independent -> shard across TensorCores on v7x.
            dimension_semantics=("parallel",),
            # Tile math: 2*(tb*150 + tb*128)*4 B + 150*128*4 B  <<  8 MiB,
            # leaving plenty of headroom even on v7x's 64 MiB VMEM.
            vmem_limit_bytes=8 << 20,
        ),
    )(x, w_eff, b_eff)

    # Strip batch padding and the lane padding of the 5-wide output.
    return out[:B, : DIMS[-1]]


# ----------------------------------------------------------------------------
# Params / reference (unchanged: the original 6-layer chain).
# ----------------------------------------------------------------------------
def init_params(key):
    """Deterministic init mimicking PyTorch Linear default U[-1/sqrt(fan_in), +]."""
    weights, biases = [], []
    for i in range(N_LAYERS):
        fan_in, fan_out = DIMS[i], DIMS[i + 1]
        key, kw, kb = jax.random.split(key, 3)
        bound = 1.0 / (fan_in ** 0.5)
        # Stored already transposed: (in, out), so forward is x @ W.
        w = jax.random.uniform(kw, (fan_in, fan_out), jnp.float32, -bound, bound)
        b = jax.random.uniform(kb, (1, fan_out), jnp.float32, -bound, bound)
        weights.append(w)
        biases.append(b)
    return weights, biases


def reference_forward(x, weights, biases):
    h = x
    for w, b in zip(weights, biases):
        h = h @ w + b
    return h


if __name__ == "__main__":
    key = jax.random.PRNGKey(0)
    key, kx = jax.random.split(key)

    batch = 8
    x = jax.random.normal(kx, (batch, DIMS[0]), jnp.float32)

    weights, biases = init_params(key)

    out = mlp_forward(x, weights, biases)
    out = jax.block_until_ready(out)

    ref = reference_forward(x, weights, biases)
    assert out.shape == (batch, DIMS[-1])
    assert jnp.allclose(out, ref, atol=1e-4, rtol=1e-4), "mismatch vs reference"

    print("KERNEL_OK")
</pallas_src>

<mosaic_0001>
module attributes {stable_mosaic.version = 11 : i64} {
  func.func @mlp_kernel(%arg0: i32, %arg1: memref<8x150xf32, #tpu.memory_space<vmem>>, %arg2: memref<150x128xf32, #tpu.memory_space<vmem>>, %arg3: memref<1x128xf32, #tpu.memory_space<vmem>>, %arg4: memref<8x128xf32, #tpu.memory_space<vmem>>) attributes {dimension_semantics = [#tpu.dimension_semantics<parallel>], iteration_bounds = array<i64: 1>, scalar_prefetch = 0 : i64, scratch_operands = 0 : i64, tpu.core_type = #tpu.core_type<tc>, window_params = [{transform_indices = @transform_0, window_bounds = array<i64: 8, 150>}, {pipeline_mode = #tpu.pipeline_mode<synchronous>, transform_indices = @transform_1, window_bounds = array<i64: 150, 128>}, {pipeline_mode = #tpu.pipeline_mode<synchronous>, transform_indices = @transform_2, window_bounds = array<i64: 1, 128>}, {transform_indices = @transform_3, window_bounds = array<i64: 8, 128>}]} {
    %c0 = arith.constant 0 : index
    %c0_0 = arith.constant 0 : index
    %0 = vector.load %arg1[%c0, %c0_0] : memref<8x150xf32, #tpu.memory_space<vmem>>, vector<8x150xf32>
    %c0_1 = arith.constant 0 : index
    %c0_2 = arith.constant 0 : index
    %1 = vector.load %arg2[%c0_1, %c0_2] : memref<150x128xf32, #tpu.memory_space<vmem>>, vector<150x128xf32>
    %cst = arith.constant dense<0.000000e+00> : vector<8x128xf32>
    %2 = tpu.matmul %0, %1, %cst {dimension_numbers = #tpu.dot_dimension_numbers<[1], [0], [0], [1], [0, 0, 1, 1], [], []>} : vector<8x150xf32>, vector<150x128xf32>, vector<8x128xf32> -> vector<8x128xf32>
    %c0_3 = arith.constant 0 : index
    %c0_4 = arith.constant 0 : index
    %3 = vector.load %arg3[%c0_3, %c0_4] : memref<1x128xf32, #tpu.memory_space<vmem>>, vector<1x128xf32>
    %4 = vector.broadcast %3 : vector<1x128xf32> to vector<8x128xf32>
    %5 = arith.addf %2, %4 : vector<8x128xf32>
    %c0_5 = arith.constant 0 : index
    %c0_6 = arith.constant 0 : index
    %6 = vector.load %arg4[%c0_5, %c0_6] : memref<8x128xf32, #tpu.memory_space<vmem>>, vector<8x128xf32>
    tpu.vector_store %arg4[%c0_5, %c0_6], %5 {strides = array<i32>} : memref<8x128xf32, #tpu.memory_space<vmem>>, vector<8x128xf32>,
    return
  }
  func.func @transform_0(%arg0: i32) -> (i32, i32) {
    %c0_i32 = arith.constant 0 : i32
    %c0_i32_0 = arith.constant 0 : i32
    return %arg0, %c0_i32 : i32, i32
  }
  func.func @transform_1(%arg0: i32) -> (i32, i32) {
    %c0_i32 = arith.constant 0 : i32
    %c0_i32_0 = arith.constant 0 : i32
    %c0_i32_1 = arith.constant 0 : i32
    return %c0_i32, %c0_i32_0 : i32, i32
  }
  func.func @transform_2(%arg0: i32) -> (i32, i32) {
    %c0_i32 = arith.constant 0 : i32
    %c0_i32_0 = arith.constant 0 : i32
    %c0_i32_1 = arith.constant 0 : i32
    return %c0_i32, %c0_i32_0 : i32, i32
  }
  func.func @transform_3(%arg0: i32) -> (i32, i32) {
    %c0_i32 = arith.constant 0 : i32
    %c0_i32_0 = arith.constant 0 : i32
    return %arg0, %c0_i32 : i32, i32
  }
}

</mosaic_0001>

<llo_original>
// kernel: tpu_custom_call.1
$region0: #{tpu_custom_call.1}
  #allocation0 [shape = 'u32[]', space=smem, size = 0x4, offset = 0x4, fixed_abs, tag = 'smem constant byte address 0x4 - core index']
  #allocation1 [shape = 'u32[72,128]{1,0:T(1,128)}', space=vmem, size = 0x9000, scoped, tag = 'internal scratch']
  %s0 = inlined_call_operand.hbm [shape: f32[8,150], index: 0, kind: input, shape index: {}]
  %s1 = inlined_call_operand.hbm [shape: f32[150,128], index: 1, kind: input, shape index: {}]
  %s2 = inlined_call_operand.vmem [shape: f32[1,128], index: 2, kind: input, shape index: {}]
  %s3 = inlined_call_operand.hbm [shape: f32[8,128], index: 3, kind: output, shape index: {}]
  %s4 = sld [smem:[#allocation0]]
  $region30: #{tpu_custom_call.1} parent=0
    _
  %s6 = ssub.s32 1, %s4
  %s7 = scalar_select 0, %s6, %s4
  $region1: #{tpu_custom_call.1} parent=0
    #allocation2 [shape = 'u8[8192]{0}', space=vmem, size = 0x2000, scoped, tag = 'input window, operand 0, single buffered']
    #allocation3 [shape = 's32[1]{0}', space=sflag, size = 0x4, scoped, tag = 'scoped memory for tpu_custom_call.1']
    #allocation4 [shape = 's32[1]{0}', space=sflag, size = 0x4, scoped, tag = 'scoped memory for tpu_custom_call.1']
    #allocation5 [shape = 'u8[77824]{0}', space=vmem, size = 0x13000, scoped, tag = 'input window, operand 1, single buffered']
    #allocation6 [shape = 's32[1]{0}', space=sflag, size = 0x4, scoped, tag = 'scoped memory for tpu_custom_call.1']
    #allocation7 [shape = 'u8[4096]{0}', space=vmem, size = 0x1000, scoped, tag = 'output window, operand 0, single buffered']
    %8 = vsyncpa [#allocation3], 0
    %9 = vsyncpa [#allocation6], 0
    %10 = vsyncpa [#allocation4], 0
    // Predicated region
    $region2: #{tpu_custom_call.1} parent=1 // pred_check
      _
    $region3: #{tpu_custom_call.1} parent=1 // pred_check_branch
      %12 = sbr.rel (0) target = $region5
    $region4: #{tpu_custom_call.1} parent=1 // pred_region
      %14 = vsyncadd [#allocation3], 0
      %s16 = sshll.u32 %s0, 4
      %s17 = int_to_ptr.hbm [resolvable:$true] %s16
      %s18 = sshll.u32 [#allocation2], 4
      %s19 = int_to_ptr.vmem [resolvable:$true] %s18
      %21 = dma.hbm_to_vmem [thread:$0]  %s17, 256, %s19, [#allocation3]
    $region5: #{tpu_custom_call.1} parent=1 // pred_fallthru
      _
    // Predicated region
    $region6: #{tpu_custom_call.1} parent=1 // pred_check
      _
    $region7: #{tpu_custom_call.1} parent=1 // pred_check_branch
      %23 = sbr.rel (0) target = $region9
    $region8: #{tpu_custom_call.1} parent=1 // pred_region
      %25 = vsyncadd [#allocation6], 0
      %s26 = sshll.u32 %s1, 4
      %s27 = int_to_ptr.hbm [resolvable:$true] %s26
      %s28 = sshll.u32 [#allocation5], 4
      %s29 = int_to_ptr.vmem [resolvable:$true] %s28
      %34 = dma.hbm_to_vmem [thread:$0]  %s27, 2432, %s29, [#allocation6], 128, 128, 8
    $region9: #{tpu_custom_call.1} parent=1 // pred_fallthru
      _
    // Predicated region
    $region10: #{tpu_custom_call.1} parent=1 // pred_check
      _
    $region11: #{tpu_custom_call.1} parent=1 // pred_check_branch
      %36 = sbr.rel (0) target = $region13
    $region12: #{tpu_custom_call.1} parent=1 // pred_region
      _
    $region13: #{tpu_custom_call.1} parent=1 // pred_fallthru
      _
    // Predicated region
    $region14: #{tpu_custom_call.1} parent=1 // pred_check
      _
    $region15: #{tpu_custom_call.1} parent=1 // pred_check_branch
      %38 = sbr.rel (0) target = $region17
    $region16: #{tpu_custom_call.1} parent=1 // pred_region
      %40 = dma.done [#allocation3], 256
    $region17: #{tpu_custom_call.1} parent=1 // pred_fallthru
      _
    // Predicated region
    $region18: #{tpu_custom_call.1} parent=1 // pred_check
      _
    $region19: #{tpu_custom_call.1} parent=1 // pred_check_branch
      %42 = sbr.rel (0) target = $region21
    $region20: #{tpu_custom_call.1} parent=1 // pred_region
      %44 = dma.done [#allocation6], 2432
    $region21: #{tpu_custom_call.1} parent=1 // pred_fallthru
      _
    %v45 = vld [vmem:[#allocation2] sm:$0xff]
    %v46 = vld [vmem:[#allocation2 + $0x8] sm:$0xff]
    %v47 = vld [vmem:[#allocation5] sm:$0xff]
    %v48 = vld [vmem:[#allocation5 + $0x8] sm:$0xff]
    %v49 = vld [vmem:[#allocation5 + $0x10] sm:$0xff]
    %v50 = vld [vmem:[#allocation5 + $0x18] sm:$0xff]
    %v51 = vld [vmem:[#allocation5 + $0x20] sm:$0xff]
    %v52 = vld [vmem:[#allocation5 + $0x28] sm:$0xff]
    %v53 = vld [vmem:[#allocation5 + $0x30] sm:$0xff]
    %v54 = vld [vmem:[#allocation5 + $0x38] sm:$0xff]
    %v55 = vld [vmem:[#allocation5 + $0x40] sm:$0xff]
    %v56 = vld [vmem:[#allocation5 + $0x48] sm:$0xff]
    %v57 = vld [vmem:[#allocation5 + $0x50] sm:$0xff]
    %v58 = vld [vmem:[#allocation5 + $0x58] sm:$0xff]
    %v59 = vld [vmem:[#allocation5 + $0x60] sm:$0xff]
    %v60 = vld [vmem:[#allocation5 + $0x68] sm:$0xff]
    %v61 = vld [vmem:[#allocation5 + $0x70] sm:$0xff]
    %v62 = vld [vmem:[#allocation5 + $0x78] sm:$0xff]
    %v63 = vld [vmem:[#allocation5 + $0x80] sm:$0xff]
    %v64 = vld [vmem:[#allocation5 + $0x88] sm:$0xff]
    %v65 = vld [vmem:[#allocation5 + $0x90] sm:$0x3f]
    %v66 = vld [vmem:[%s2] sm:$0x1]
    %v68 = vperm.slane %v66, 0
    %vm70 = vcmask 179200
    %v72 = vsel %vm70, %v46, 0
    %vm74 = vcmask 1045504
    %v76 = vsel %vm74, %v65, 0
    %78 = vmatpush.msra.mxu0 %v62
    %79 = vmatpush.msra.mxu0 %v61
    %80 = vmatpush.msra.mxu0 %v60
    %81 = vmatpush.msra.mxu0 %v59
    %82 = vmatpush.msra.mxu0 %v58
    %83 = vmatpush.msra.mxu0 %v57
    %84 = vmatpush.msra.mxu0 %v56
    %85 = vmatpush.msra.mxu0 %v55
    %86 = vmatpush.msra.mxu0 %v54
    %87 = vmatpush.msra.mxu0 %v53
    %88 = vmatpush.msra.mxu0 %v52
    %89 = vmatpush.msra.mxu0 %v51
    %90 = vmatpush.msra.mxu0 %v50
    %91 = vmatpush.msra.mxu0 %v49
    %92 = vmatpush.msra.mxu0 %v48
    %93 = vmatpush.msra.mxu0 %v47
    %94 = vmatmul.f32.gmra.mxu0 %v45
    %v95 = vpop.f32.mrf.mxu0
    %v96 = vadd.f32 %v68, %v95
    %97 = vdwg.mxu0
    %98 = vmatpush.msra.mxu0 0.0
    %99 = vmatpush.msra.mxu0 0.0
    %100 = vmatpush.msra.mxu0 0.0
    %101 = vmatpush.msra.mxu0 0.0
    %102 = vmatpush.msra.mxu0 0.0
    %103 = vmatpush.msra.mxu0 0.0
    %104 = vmatpush.msra.mxu0 0.0
    %105 = vmatpush.msra.mxu0 0.0
    %106 = vmatpush.msra.mxu0 0.0
    %107 = vmatpush.msra.mxu0 0.0
    %108 = vmatpush.msra.mxu0 0.0
    %109 = vmatpush.msra.mxu0 0.0
    %110 = vmatpush.msra.mxu0 0.0
    %111 = vmatpush.msra.mxu0 %v76
    %112 = vmatpush.msra.mxu0 %v64
    %113 = vmatpush.msra.mxu0 %v63
    %114 = vmatmul.f32.gmra.mxu0 %v72
    %v115 = vpop.f32.mrf.mxu0
    %v116 = vadd.f32 %v96, %v115
    %117 = vdwg.mxu0
    %118 = vst [vmem:[#allocation7] sm:$0xff] %v116
    // Predicated region
    $region22: #{tpu_custom_call.1} parent=1 // pred_check
      _
    $region23: #{tpu_custom_call.1} parent=1 // pred_check_branch
      %120 = sbr.rel (0) target = $region25
    $region24: #{tpu_custom_call.1} parent=1 // pred_region
      %122 = vsyncadd [#allocation4], 0
      %s124 = sshll.u32 [#allocation7], 4
      %s125 = int_to_ptr.vmem [resolvable:$true] %s124
      %s126 = sshll.u32 %s3, 4
      %s127 = int_to_ptr.hbm [resolvable:$true] %s126
      %129 = dma.vmem_to_hbm [thread:$0]  %s125, 128, %s127, [#allocation4]
    $region25: #{tpu_custom_call.1} parent=1 // pred_fallthru
      _
    // Predicated region
    $region26: #{tpu_custom_call.1} parent=1 // pred_check
      _
    $region27: #{tpu_custom_call.1} parent=1 // pred_check_branch
      %131 = sbr.rel (0) target = $region29
    $region28: #{tpu_custom_call.1} parent=1 // pred_region
      %133 = dma.done [#allocation4], 128
    $region29: #{tpu_custom_call.1} parent=1 // pred_fallthru
      _
    %134 = vsyncpa [#allocation3], 1
    %135 = vsyncpa [#allocation6], 1
    %136 = vsyncpa [#allocation4], 1

</llo_original>
